<compile_context>
chip_gen: v6e
topology: v6e:2x2x1
jax: 0.10.0
libtpu: 0.0.40
codegen_flags: <defaults>
</compile_context>

<pallas_src>
import jax
import jax.numpy as jnp
from jax import lax
from jax.experimental import pallas as pl
from jax.experimental.pallas import tpu as pltpu


def _g_spa_kernel(x_ref, w_ref, o_ref):
    # x_ref: (1, V*T, C1)  bf16  channels-last activations, rows are v-major
    # w_ref: (2, C1, C2)   bf16  stacked [W1^T, W2^T], shared across the grid
    # o_ref: (1, V, T, T)  f32   g[n] block
    V, T = o_ref.shape[1], o_ref.shape[2]
    C2 = w_ref.shape[2]

    x = x_ref[0]                                                   # (V*T, C1)

    # 1x1 conv == channel matmul on the MXU; M = V*T = 128 rows per push.
    q = jnp.dot(x, w_ref[0], preferred_element_type=jnp.float32)  # (V*T, C2) f32
    k = jnp.dot(x, w_ref[1], preferred_element_type=jnp.float32)  # (V*T, C2) f32

    # v-major rows -> leading-batch layout. Only leading dims are regrouped
    # (minor dim untouched), so this reshape is layout-free.
    q = q.reshape(V, T, C2).astype(jnp.bfloat16)
    k = k.reshape(V, T, C2).astype(jnp.bfloat16)

    # logits[v, t, s] = sum_c q[v, t, c] * k[v, s, c]
    # Batched over V with the contraction expressed directly (trans_b via
    # dimension_numbers; no materialized k.T).
    s = lax.dot_general(
        q, k,
        dimension_numbers=(((2,), (2,)), ((0,), (0,))),
        preferred_element_type=jnp.float32,
    )                                                              # (V, T, T) f32

    # Softmax over the last dim, f32 throughout; reciprocal on the EUP.
    m = jnp.max(s, axis=-1, keepdims=True)
    e = jnp.exp(s - m)
    denom = jnp.sum(e, axis=-1, keepdims=True)
    o_ref[0] = (e * pl.reciprocal(denom, approx=True)).astype(o_ref.dtype)


def compute_g_spa_pallas(x_nchw, w1, w2):
    """x_nchw: (N, C1, T, V) float32; w1, w2: (C2, C1) 1x1-conv weights (no bias)."""
    N, C1, T, V = x_nchw.shape
    C2 = w1.shape[0]

    # Layout glue: one fused XLA pass over x (transpose + bf16 downcast).
    # NCHW -> (N, V*T, C1) channels-last, v-major rows, so every in-kernel op
    # is a plain 2-D / leading-batch MXU matmul.
    x_vt_c = jnp.transpose(x_nchw, (0, 3, 2, 1)).reshape(N, V * T, C1)
    x_vt_c = x_vt_c.astype(jnp.bfloat16)

    # Stack both conv weights into a single operand: one DMA, shared by all
    # grid steps (weights are tiny and stay resident in VMEM).
    w = jnp.stack([jnp.transpose(w1), jnp.transpose(w2)]).astype(jnp.bfloat16)  # (2, C1, C2)

    out = pl.pallas_call(
        _g_spa_kernel,
        out_shape=jax.ShapeDtypeStruct((N, V, T, T), jnp.float32),
        grid=(N,),
        in_specs=[
            pl.BlockSpec((1, V * T, C1), lambda n: (n, 0, 0)),
            pl.BlockSpec((2, C1, C2), lambda n: (0, 0, 0)),
        ],
        out_specs=pl.BlockSpec((1, V, T, T), lambda n: (n, 0, 0, 0)),
        compiler_params=pltpu.CompilerParams(
            dimension_semantics=("parallel",),
        ),
    )(x_vt_c, w)
    return out


def compute_g_spa_ref(x_nchw, w1, w2):
    """Pure-JAX f32 reference mirroring the PyTorch forward exactly."""
    # 1x1 conv (no bias): out[n,c2,t,v] = sum_c1 W[c2,c1] x[n,c1,t,v]
    c1_out = jnp.einsum("oc,nctv->notv", w1, x_nchw)
    c2_out = jnp.einsum("oc,nctv->notv", w2, x_nchw)
    g1 = jnp.transpose(c1_out, (0, 3, 2, 1))   # (N, V, T, C2)
    g2 = jnp.transpose(c2_out, (0, 3, 1, 2))   # (N, V, C2, T)
    g3 = jnp.matmul(g1, g2)                    # (N, V, T, T)
    return jax.nn.softmax(g3, axis=-1)


if __name__ == "__main__":
    # Small shapes consistent with the module: x1 is (N, dim1, T, V).
    N, C1, C2, T, V = 2, 32, 32, 8, 16

    key = jax.random.PRNGKey(0)
    kx, kw1, kw2 = jax.random.split(key, 3)

    x = jax.random.normal(kx, (N, C1, T, V), dtype=jnp.float32)

    # Deterministic Conv2d-style init: U(-1/sqrt(fan_in), 1/sqrt(fan_in)), bias=False.
    bound = 1.0 / (C1 ** 0.5)
    w1 = jax.random.uniform(kw1, (C2, C1), jnp.float32, minval=-bound, maxval=bound)
    w2 = jax.random.uniform(kw2, (C2, C1), jnp.float32, minval=-bound, maxval=bound)

    out = compute_g_spa_pallas(x, w1, w2)
    out = jax.block_until_ready(out)

    ref = compute_g_spa_ref(x, w1, w2)
    assert out.shape == (N, V, T, T)
    # bf16 matmul inputs -> relaxed tolerance vs the pure-f32 reference.
    assert jnp.allclose(out, ref, atol=5e-2, rtol=5e-2), "mismatch vs reference"
    # Softmax rows must still normalize to 1 (approx reciprocal + f32 rounding).
    assert jnp.allclose(jnp.sum(out, axis=-1), 1.0, atol=2e-2), "rows not normalized"

    print("KERNEL_OK")
</pallas_src>

<mosaic_0001>
module attributes {stable_mosaic.version = 11 : i64} {
  func.func @_g_spa_kernel(%arg0: i32, %arg1: memref<1x128x32xbf16, #tpu.memory_space<vmem>>, %arg2: memref<2x32x32xbf16, #tpu.memory_space<vmem>>, %arg3: memref<1x16x8x8xf32, #tpu.memory_space<vmem>>) attributes {dimension_semantics = [#tpu.dimension_semantics<parallel>], iteration_bounds = array<i64: 2>, scalar_prefetch = 0 : i64, scratch_operands = 0 : i64, tpu.core_type = #tpu.core_type<tc>, window_params = [{transform_indices = @transform_0, window_bounds = array<i64: 1, 128, 32>}, {pipeline_mode = #tpu.pipeline_mode<synchronous>, transform_indices = @transform_1, window_bounds = array<i64: 2, 32, 32>}, {transform_indices = @transform_2, window_bounds = array<i64: 1, 16, 8, 8>}]} {
    %c0 = arith.constant 0 : index
    %c0_0 = arith.constant 0 : index
    %c0_1 = arith.constant 0 : index
    %0 = vector.load %arg1[%c0, %c0_0, %c0_1] : memref<1x128x32xbf16, #tpu.memory_space<vmem>>, vector<1x128x32xbf16>
    %1 = vector.shape_cast %0 : vector<1x128x32xbf16> to vector<128x32xbf16>
    %c0_2 = arith.constant 0 : index
    %c0_3 = arith.constant 0 : index
    %c0_4 = arith.constant 0 : index
    %2 = vector.load %arg2[%c0_2, %c0_3, %c0_4] : memref<2x32x32xbf16, #tpu.memory_space<vmem>>, vector<1x32x32xbf16>
    %3 = vector.shape_cast %2 : vector<1x32x32xbf16> to vector<32x32xbf16>
    %cst = arith.constant dense<0.000000e+00> : vector<128x32xf32>
    %4 = tpu.matmul %1, %3, %cst {dimension_numbers = #tpu.dot_dimension_numbers<[1], [0], [0], [1], [0, 0, 1, 1], [], []>} : vector<128x32xbf16>, vector<32x32xbf16>, vector<128x32xf32> -> vector<128x32xf32>
    %c1 = arith.constant 1 : index
    %c0_5 = arith.constant 0 : index
    %c0_6 = arith.constant 0 : index
    %5 = vector.load %arg2[%c1, %c0_5, %c0_6] : memref<2x32x32xbf16, #tpu.memory_space<vmem>>, vector<1x32x32xbf16>
    %6 = vector.shape_cast %5 : vector<1x32x32xbf16> to vector<32x32xbf16>
    %cst_7 = arith.constant dense<0.000000e+00> : vector<128x32xf32>
    %7 = tpu.matmul %1, %6, %cst_7 {dimension_numbers = #tpu.dot_dimension_numbers<[1], [0], [0], [1], [0, 0, 1, 1], [], []>} : vector<128x32xbf16>, vector<32x32xbf16>, vector<128x32xf32> -> vector<128x32xf32>
    %8 = vector.shape_cast %4 : vector<128x32xf32> to vector<16x8x32xf32>
    %9 = arith.truncf %8 : vector<16x8x32xf32> to vector<16x8x32xbf16>
    %10 = vector.shape_cast %7 : vector<128x32xf32> to vector<16x8x32xf32>
    %11 = arith.truncf %10 : vector<16x8x32xf32> to vector<16x8x32xbf16>
    %cst_8 = arith.constant dense<0.000000e+00> : vector<16x8x8xf32>
    %12 = tpu.matmul %9, %11, %cst_8 {dimension_numbers = #tpu.dot_dimension_numbers<[2], [2], [1], [1], [0, 0, 0, 1, 1, 1], [0], [0]>} : vector<16x8x32xbf16>, vector<16x8x32xbf16>, vector<16x8x8xf32> -> vector<16x8x8xf32>
    %cst_9 = arith.constant dense<0xFF800000> : vector<16x8xf32>
    %13 = vector.multi_reduction <maximumf>, %12, %cst_9 [2] : vector<16x8x8xf32> to vector<16x8xf32>
    %14 = vector.shape_cast %13 : vector<16x8xf32> to vector<16x8x1xf32>
    %15 = vector.broadcast %14 : vector<16x8x1xf32> to vector<16x8x8xf32>
    %16 = arith.subf %12, %15 : vector<16x8x8xf32>
    %17 = math.exp %16 : vector<16x8x8xf32>
    %cst_10 = arith.constant dense<0.000000e+00> : vector<16x8xf32>
    %18 = vector.multi_reduction <add>, %17, %cst_10 [2] : vector<16x8x8xf32> to vector<16x8xf32>
    %19 = vector.shape_cast %18 : vector<16x8xf32> to vector<16x8x1xf32>
    %20 = tpu.reciprocal %19 {approx = true} : vector<16x8x1xf32> -> vector<16x8x1xf32>
    %21 = vector.broadcast %20 : vector<16x8x1xf32> to vector<16x8x8xf32>
    %22 = arith.mulf %17, %21 : vector<16x8x8xf32>
    %c0_11 = arith.constant 0 : index
    %c0_12 = arith.constant 0 : index
    %c0_13 = arith.constant 0 : index
    %c0_14 = arith.constant 0 : index
    %23 = vector.load %arg3[%c0_11, %c0_12, %c0_13, %c0_14] : memref<1x16x8x8xf32, #tpu.memory_space<vmem>>, vector<1x16x8x8xf32>
    %24 = vector.shape_cast %23 : vector<1x16x8x8xf32> to vector<16x8x8xf32>
    %25 = vector.shape_cast %22 : vector<16x8x8xf32> to vector<1x16x8x8xf32>
    tpu.vector_store %arg3[%c0_11, %c0_12, %c0_13, %c0_14], %25 {strides = array<i32>} : memref<1x16x8x8xf32, #tpu.memory_space<vmem>>, vector<1x16x8x8xf32>,
    return
  }
  func.func @transform_0(%arg0: i32) -> (i32, i32, i32) {
    %c0_i32 = arith.constant 0 : i32
    %c0_i32_0 = arith.constant 0 : i32
    %c0_i32_1 = arith.constant 0 : i32
    return %arg0, %c0_i32, %c0_i32_0 : i32, i32, i32
  }
  func.func @transform_1(%arg0: i32) -> (i32, i32, i32) {
    %c0_i32 = arith.constant 0 : i32
    %c0_i32_0 = arith.constant 0 : i32
    %c0_i32_1 = arith.constant 0 : i32
    %c0_i32_2 = arith.constant 0 : i32
    return %c0_i32, %c0_i32_0, %c0_i32_1 : i32, i32, i32
  }
  func.func @transform_2(%arg0: i32) -> (i32, i32, i32, i32) {
    %c0_i32 = arith.constant 0 : i32
    %c0_i32_0 = arith.constant 0 : i32
    %c0_i32_1 = arith.constant 0 : i32
    %c0_i32_2 = arith.constant 0 : i32
    return %arg0, %c0_i32, %c0_i32_0, %c0_i32_1 : i32, i32, i32, i32
  }
}

</mosaic_0001>

<llo_original>
// kernel: tpu_custom_call.1
$region0: #{tpu_custom_call.1}
  #allocation0 [shape = 'u32[]', space=smem, size = 0x4, offset = 0x4, fixed_abs, tag = 'smem constant byte address 0x4 - core index']
  #allocation1 [shape = 'u32[144,128]{1,0:T(1,128)}', space=vmem, size = 0x12000, scoped, tag = 'internal scratch']
  %s0 = inlined_call_operand.vmem [shape: bf16[2,128,32], index: 0, kind: input, shape index: {}]
  %s1 = inlined_call_operand.vmem [shape: bf16[2,32,32], index: 1, kind: input, shape index: {}]
  %s2 = inlined_call_operand.vmem [shape: f32[2,16,8,8], index: 2, kind: output, shape index: {}]
  %s3 = sld [smem:[#allocation0]]
  $region41: #{tpu_custom_call.1} parent=0
    _
  %s5 = ssub.s32 1, %s3
  %s6 = scalar_select 0, %s5, %s3
  loop: start=0, step=1, limit=4
  $region2: #{tpu_custom_call.1} parent=0 // loop_pre_header
    _
  $region3: #{tpu_custom_call.1} parent=0 // loop_header
    %s8 = sphi 0, %s12
    %p9 = scmp.ge.s32.totalorder %s8, 4
    %s18 = sphi 0, %s20
    %s21 = sphi 0, %s18
    %s22 = sphi 0, %s21
    %s38 = sphi 0, %s22
    %s42 = sphi 0, %s42
    %s44 = sphi 0, %s42
    %s45 = sphi 0, %s44
    %s59 = sphi 0, %s45
    %s65 = sphi 0, %s67
    %s68 = sphi 0, %s65
    %s69 = sphi 0, %s68
    %s85 = sphi 0, %s69
  $region4: #{tpu_custom_call.1} parent=0 // loop_header_branch
    %11 = sbr.rel (%p9) target = $region8
  $region5: #{tpu_custom_call.1} parent=0 // loop_body
    %s13 = ssub.s32 %s8, 1
    %s14 = ssub.s32 %s8, 2
    %s15 = sadd.s32 %s8, 1
    %s16 = ssub.s32 %s8, %s15
    %p17 = scmp.eq.s32.totalorder %s16, 0
    %s19 = sadd.s32 %s18, 1
    %s20 = scalar_select %p17, %s18, %s19
    %p23 = pneg %p17
    %p24 = scmp.eq.s32.totalorder %s8, 1
    %p25 = por %p23, %p24
    %p26 = scmp.ne.s32.totalorder %s18, %s21
    %p27 = scmp.eq.s32.totalorder %s8, 0
    %p28 = por %p26, %p27
    %p29 = scmp.ne.s32.totalorder %s18, %s21
    %p30 = scmp.eq.s32.totalorder %s13, 1
    %p31 = por %p29, %p30
    %p32 = scmp.ne.s32.totalorder %s21, %s22
    %p33 = scmp.eq.s32.totalorder %s13, 0
    %p34 = por %p32, %p33
    %p35 = scmp.ne.s32.totalorder %s21, %s22
    %p36 = scmp.eq.s32.totalorder %s14, 1
    %p37 = por %p35, %p36
    %p39 = scmp.ne.s32.totalorder %s22, %s38
    %p40 = scmp.eq.s32.totalorder %s14, 0
    %p41 = por %p39, %p40
    %s43 = sadd.s32 %s42, 1
    %p46 = scmp.eq.s32.totalorder %s8, 1
    %p47 = scmp.ne.s32.totalorder %s42, %s44
    %p48 = scmp.eq.s32.totalorder %s8, 0
    %p49 = por %p47, %p48
    %p50 = scmp.ne.s32.totalorder %s42, %s44
    %p51 = scmp.eq.s32.totalorder %s13, 1
    %p52 = por %p50, %p51
    %p53 = scmp.ne.s32.totalorder %s44, %s45
    %p54 = scmp.eq.s32.totalorder %s13, 0
    %p55 = por %p53, %p54
    %p56 = scmp.ne.s32.totalorder %s44, %s45
    %p57 = scmp.eq.s32.totalorder %s14, 1
    %p58 = por %p56, %p57
    %p60 = scmp.ne.s32.totalorder %s45, %s59
    %p61 = scmp.eq.s32.totalorder %s14, 0
    %p62 = por %p60, %p61
    %s63 = ssub.s32 %s8, %s15
    %p64 = scmp.eq.s32.totalorder %s63, 0
    %s66 = sadd.s32 %s65, 1
    %s67 = scalar_select %p64, %s65, %s66
    %p70 = pneg %p64
    %p71 = scmp.eq.s32.totalorder %s8, 1
    %p72 = por %p70, %p71
    %p73 = scmp.ne.s32.totalorder %s65, %s68
    %p74 = scmp.eq.s32.totalorder %s8, 0
    %p75 = por %p73, %p74
    %p76 = scmp.ne.s32.totalorder %s65, %s68
    %p77 = scmp.eq.s32.totalorder %s13, 1
    %p78 = por %p76, %p77
    %p79 = scmp.ne.s32.totalorder %s68, %s69
    %p80 = scmp.eq.s32.totalorder %s13, 0
    %p81 = por %p79, %p80
    %p82 = scmp.ne.s32.totalorder %s68, %s69
    %p83 = scmp.eq.s32.totalorder %s14, 1
    %p84 = por %p82, %p83
    %p86 = scmp.ne.s32.totalorder %s69, %s85
    %p87 = scmp.eq.s32.totalorder %s14, 0
    %p88 = por %p86, %p87
    %p89 = scmp.le.s32.totalorder 1, %s8
    %p90 = scmp.lt.s32.totalorder %s8, 3
    %p91 = pnand %p89, %p90
    %p92 = pneg %p91
    // Predicated region
    $region9: #{tpu_custom_call.1} parent=5 // pred_check
      _
    $region10: #{tpu_custom_call.1} parent=5 // pred_check_branch
      %94 = sbr.rel (%p91) target = $region12
    $region11: #{tpu_custom_call.1} parent=5 // pred_region
      %s95 = ssub.s32 %s8, 1
      // Predicated region
      $region13: #{tpu_custom_call.1} parent=11 // pred_check
        %p96 = pneg %p55
      $region14: #{tpu_custom_call.1} parent=11 // pred_check_branch
        %98 = sbr.rel (%p96) target = $region16
      $region15: #{tpu_custom_call.1} parent=11 // pred_region
        _
      $region16: #{tpu_custom_call.1} parent=11 // pred_fallthru
        _
    $region12: #{tpu_custom_call.1} parent=5 // pred_fallthru
      _
    %p99 = scmp.lt.s32.totalorder %s8, 2
    // Predicated region
    $region17: #{tpu_custom_call.1} parent=5 // pred_check
      %p100 = pneg %p99
    $region18: #{tpu_custom_call.1} parent=5 // pred_check_branch
      %102 = sbr.rel (%p100) target = $region20
    $region19: #{tpu_custom_call.1} parent=5 // pred_region
      // Predicated region
      $region21: #{tpu_custom_call.1} parent=19 // pred_check
        %p103 = pneg %p28
      $region22: #{tpu_custom_call.1} parent=19 // pred_check_branch
        %105 = sbr.rel (%p103) target = $region24
      $region23: #{tpu_custom_call.1} parent=19 // pred_region
        %p106 = scmp.lt.s32.totalorder %s8, 1
        %s107 = scalar_select %p106, %s8, 1
        %s108 = smul.addr %s107, 16
        %s109 = smul.addr %s108, 4
        %s110 = scalar_lea.vmem %s0, %s109
      $region24: #{tpu_custom_call.1} parent=19 // pred_fallthru
        _
    $region20: #{tpu_custom_call.1} parent=5 // pred_fallthru
      _
    %p111 = scmp.le.s32.totalorder 1, %s8
    %p112 = scmp.lt.s32.totalorder %s8, 3
    %p113 = pnand %p111, %p112
    %p114 = pneg %p113
    // Predicated region
    $region25: #{tpu_custom_call.1} parent=5 // pred_check
      _
    $region26: #{tpu_custom_call.1} parent=5 // pred_check_branch
      %116 = sbr.rel (%p113) target = $region28
    $region27: #{tpu_custom_call.1} parent=5 // pred_region
      %s117 = ssub.s32 %s8, 1
      %p118 = scmp.lt.s32.totalorder %s13, 1
      %s119 = scalar_select %p118, %s13, 1
      %s120 = smul.addr %s119, 16
      %s121 = smul.addr %s120, 4
      %s122 = scalar_lea.vmem %s0, %s121
      %p123 = pneg %p34
      %p124 = pneg %p31
      %p125 = pneg %p55
      %p126 = pneg %p52
      %p127 = pneg %p81
      %p128 = pneg %p78
      %p129 = scmp.lt.s32.totalorder %s13, 1
      %s130 = scalar_select %p129, %s13, 1
      %s131 = smul.addr %s130, 16
      %s132 = smul.addr %s131, 8
      %s133 = scalar_lea.vmem %s2, %s132
      %p134 = scmp.lt.s32.totalorder %s13, 1
      %s135 = scalar_select %p134, %s13, 1
      %s136 = smul.addr %s135, 16
      %s137 = smul.addr %s136, 4
      %s138 = scalar_lea.vmem %s0, %s137
      %p139 = scmp.lt.s32.totalorder %s13, 1
      %s140 = scalar_select %p139, %s13, 1
      %s141 = smul.addr %s140, 16
      %s142 = smul.addr %s141, 8
      %s143 = scalar_lea.vmem %s2, %s142
      %v145 = vld [vmem:[%s138] sm:$0xf]
      %v146 = vld [vmem:[%s138 + $0x4] sm:$0xf]
      %v147 = vld [vmem:[%s138 + $0x8] sm:$0xf]
      %v148 = vld [vmem:[%s138 + $0xc] sm:$0xf]
      %v149 = vld [vmem:[%s138 + $0x10] sm:$0xf]
      %v150 = vld [vmem:[%s138 + $0x14] sm:$0xf]
      %v151 = vld [vmem:[%s138 + $0x18] sm:$0xf]
      %v152 = vld [vmem:[%s138 + $0x1c] sm:$0xf]
      %v153 = vld [vmem:[%s138 + $0x20] sm:$0xf]
      %v154 = vld [vmem:[%s138 + $0x24] sm:$0xf]
      %v155 = vld [vmem:[%s138 + $0x28] sm:$0xf]
      %v156 = vld [vmem:[%s138 + $0x2c] sm:$0xf]
      %v157 = vld [vmem:[%s138 + $0x30] sm:$0xf]
      %v158 = vld [vmem:[%s138 + $0x34] sm:$0xf]
      %v159 = vld [vmem:[%s138 + $0x38] sm:$0xf]
      %v160 = vld [vmem:[%s138 + $0x3c] sm:$0xf]
      %v161 = vld [vmem:[%s1] sm:$0xf]
      %v162 = vld [vmem:[%s1 + $0x4] sm:$0xf]
      %v163 = vld [vmem:[%s1 + $0x8] sm:$0xf]
      %v164 = vld [vmem:[%s1 + $0xc] sm:$0xf]
      %v181 = vunpack.c.l.b16 %v145
      %v182 = vunpack.c.l.b16 %v146
      %v183 = vunpack.c.l.b16 %v147
      %v184 = vunpack.c.l.b16 %v148
      %v185 = vunpack.c.l.b16 %v149
      %v186 = vunpack.c.l.b16 %v150
      %v187 = vunpack.c.l.b16 %v151
      %v188 = vunpack.c.l.b16 %v152
      %v189 = vunpack.c.l.b16 %v153
      %v190 = vunpack.c.l.b16 %v154
      %v191 = vunpack.c.l.b16 %v155
      %v192 = vunpack.c.l.b16 %v156
      %v193 = vunpack.c.l.b16 %v157
      %v194 = vunpack.c.l.b16 %v158
      %v195 = vunpack.c.l.b16 %v159
      %v196 = vunpack.c.l.b16 %v160
      %v197 = vpack.c.b16 %v182, %v181
      %v198 = vpack.c.b16 %v184, %v183
      %v199 = vpack.c.b16 %v186, %v185
      %v200 = vpack.c.b16 %v188, %v187
      %v201 = vpack.c.b16 %v190, %v189
      %v202 = vpack.c.b16 %v192, %v191
      %v203 = vpack.c.b16 %v194, %v193
      %v204 = vpack.c.b16 %v196, %v195
      %v209 = vunpack.c.l.b16 %v161
      %v210 = vunpack.c.l.b16 %v162
      %v211 = vunpack.c.l.b16 %v163
      %v212 = vunpack.c.l.b16 %v164
      %v213 = vpack.c.b16 %v210, %v209
      %v214 = vpack.c.b16 %v212, %v211
      %vm217 = vcmask 261120
      %v219 = vsel %vm217, %v197, 0
      %v222 = vsel %vm217, %v198, 0
      %v225 = vsel %vm217, %v199, 0
      %v228 = vsel %vm217, %v200, 0
      %v231 = vsel %vm217, %v201, 0
      %v234 = vsel %vm217, %v202, 0
      %v237 = vsel %vm217, %v203, 0
      %v240 = vsel %vm217, %v204, 0
      %242 = vmatprep.subr.bf16.mxu0 0
      %243 = vmatpush1.bf16.msra.mxu0 0
      %244 = vmatprep.subr.bf16.mxu0 0
      %245 = vmatpush1.bf16.msra.mxu0 0
      %246 = vmatprep.subr.bf16.mxu0 0
      %247 = vmatpush1.bf16.msra.mxu0 0
      %248 = vmatprep.subr.bf16.mxu0 0
      %249 = vmatpush1.bf16.msra.mxu0 0
      %250 = vmatprep.subr.bf16.mxu0 0
      %251 = vmatpush1.bf16.msra.mxu0 0
      %252 = vmatprep.subr.bf16.mxu0 0
      %253 = vmatpush1.bf16.msra.mxu0 0
      %254 = vmatprep.subr.bf16.mxu0 0
      %255 = vmatpush1.bf16.msra.mxu0 %v214
      %256 = vmatprep.subr.bf16.mxu0 0
      %257 = vmatpush1.bf16.msra.mxu0 %v213
      %258 = vmatprep.subr.bf16.mxu0 0
      %259 = vmatpush2.bf16.msra.mxu0 0
      %260 = vmatprep.subr.bf16.mxu0 0
      %261 = vmatpush2.bf16.msra.mxu0 0
      %262 = vmatprep.subr.bf16.mxu0 0
      %263 = vmatpush2.bf16.msra.mxu0 0
      %264 = vmatprep.subr.bf16.mxu0 0
      %265 = vmatpush2.bf16.msra.mxu0 0
      %266 = vmatprep.subr.bf16.mxu0 0
      %267 = vmatpush2.bf16.msra.mxu0 0
      %268 = vmatprep.subr.bf16.mxu0 0
      %269 = vmatpush2.bf16.msra.mxu0 0
      %270 = vmatprep.subr.bf16.mxu0 0
      %271 = vmatpush2.bf16.msra.mxu0 0
      %272 = vmatprep.subr.bf16.mxu0 0
      %273 = vmatpush2.bf16.msra.mxu0 0
      %274 = vmatprep.mubr.bf16.mxu0 0
      %275 = vmatmul.mubr.bf16.gmra.mxu0 %v219
      %v276 = vpop.f32.mrf.mxu0
      %v277 = vadd.f32 0.0, %v276
      %v278 = vpop.f32.mrf.mxu0
      %v279 = vpop.f32.mrf.mxu0
      %v280 = vadd.f32 0.0, %v279
      %v281 = vpop.f32.mrf.mxu0
      %282 = vmatprep.mubr.bf16.mxu0 0
      %283 = vmatmul.mubr.bf16.gmra.mxu0 %v222
      %v284 = vpop.f32.mrf.mxu0
      %v285 = vadd.f32 0.0, %v284
      %v286 = vpop.f32.mrf.mxu0
      %v287 = vpop.f32.mrf.mxu0
      %v288 = vadd.f32 0.0, %v287
      %v289 = vpop.f32.mrf.mxu0
      %290 = vmatprep.mubr.bf16.mxu0 0
      %291 = vmatmul.mubr.bf16.gmra.mxu0 %v225
      %v292 = vpop.f32.mrf.mxu0
      %v293 = vadd.f32 0.0, %v292
      %v294 = vpop.f32.mrf.mxu0
      %v295 = vpop.f32.mrf.mxu0
      %v296 = vadd.f32 0.0, %v295
      %v297 = vpop.f32.mrf.mxu0
      %298 = vmatprep.mubr.bf16.mxu0 0
      %299 = vmatmul.mubr.bf16.gmra.mxu0 %v228
      %v300 = vpop.f32.mrf.mxu0
      %v301 = vadd.f32 0.0, %v300
      %v302 = vpop.f32.mrf.mxu0
      %v303 = vpop.f32.mrf.mxu0
      %v304 = vadd.f32 0.0, %v303
      %v305 = vpop.f32.mrf.mxu0
      %306 = vmatprep.mubr.bf16.mxu0 0
      %307 = vmatmul.mubr.bf16.gmra.mxu0 %v231
      %v308 = vpop.f32.mrf.mxu0
      %v309 = vadd.f32 0.0, %v308
      %v310 = vpop.f32.mrf.mxu0
      %v311 = vpop.f32.mrf.mxu0
      %v312 = vadd.f32 0.0, %v311
      %v313 = vpop.f32.mrf.mxu0
      %314 = vmatprep.mubr.bf16.mxu0 0
      %315 = vmatmul.mubr.bf16.gmra.mxu0 %v234
      %v316 = vpop.f32.mrf.mxu0
      %v317 = vadd.f32 0.0, %v316
      %v318 = vpop.f32.mrf.mxu0
      %v319 = vpop.f32.mrf.mxu0
      %v320 = vadd.f32 0.0, %v319
      %v321 = vpop.f32.mrf.mxu0
      %322 = vmatprep.mubr.bf16.mxu0 0
      %323 = vmatmul.mubr.bf16.gmra.mxu0 %v237
      %v324 = vpop.f32.mrf.mxu0
      %v325 = vadd.f32 0.0, %v324
      %v326 = vpop.f32.mrf.mxu0
      %v327 = vpop.f32.mrf.mxu0
      %v328 = vadd.f32 0.0, %v327
      %v329 = vpop.f32.mrf.mxu0
      %330 = vmatprep.mubr.bf16.mxu0 0
      %331 = vmatmul.mubr.bf16.gmra.mxu0 %v240
      %v332 = vpop.f32.mrf.mxu0
      %v333 = vadd.f32 0.0, %v332
      %v334 = vpop.f32.mrf.mxu0
      %v335 = vpop.f32.mrf.mxu0
      %v336 = vadd.f32 0.0, %v335
      %v337 = vpop.f32.mrf.mxu0
      %338 = vdwg.mxu0
      %s339 = scalar_lea.vmem %s1, 16
      %v340 = vld [vmem:[%s339] sm:$0xf]
      %v341 = vld [vmem:[%s339 + $0x4] sm:$0xf]
      %v342 = vld [vmem:[%s339 + $0x8] sm:$0xf]
      %v343 = vld [vmem:[%s339 + $0xc] sm:$0xf]
      %v348 = vunpack.c.l.b16 %v340
      %v349 = vunpack.c.l.b16 %v341
      %v350 = vunpack.c.l.b16 %v342
      %v351 = vunpack.c.l.b16 %v343
      %v352 = vpack.c.b16 %v349, %v348
      %v353 = vpack.c.b16 %v351, %v350
      %356 = vmatprep.subr.bf16.mxu0 0
      %357 = vmatpush1.bf16.msra.mxu0 0
      %358 = vmatprep.subr.bf16.mxu0 0
      %359 = vmatpush1.bf16.msra.mxu0 0
      %360 = vmatprep.subr.bf16.mxu0 0
      %361 = vmatpush1.bf16.msra.mxu0 0
      %362 = vmatprep.subr.bf16.mxu0 0
      %363 = vmatpush1.bf16.msra.mxu0 0
      %364 = vmatprep.subr.bf16.mxu0 0
      %365 = vmatpush1.bf16.msra.mxu0 0
      %366 = vmatprep.subr.bf16.mxu0 0
      %367 = vmatpush1.bf16.msra.mxu0 0
      %368 = vmatprep.subr.bf16.mxu0 0
      %369 = vmatpush1.bf16.msra.mxu0 %v353
      %370 = vmatprep.subr.bf16.mxu0 0
      %371 = vmatpush1.bf16.msra.mxu0 %v352
      %372 = vmatprep.subr.bf16.mxu0 0
      %373 = vmatpush2.bf16.msra.mxu0 0
      %374 = vmatprep.subr.bf16.mxu0 0
      %375 = vmatpush2.bf16.msra.mxu0 0
      %376 = vmatprep.subr.bf16.mxu0 0
      %377 = vmatpush2.bf16.msra.mxu0 0
      %378 = vmatprep.subr.bf16.mxu0 0
      %379 = vmatpush2.bf16.msra.mxu0 0
      %380 = vmatprep.subr.bf16.mxu0 0
      %381 = vmatpush2.bf16.msra.mxu0 0
      %382 = vmatprep.subr.bf16.mxu0 0
      %383 = vmatpush2.bf16.msra.mxu0 0
      %384 = vmatprep.subr.bf16.mxu0 0
      %385 = vmatpush2.bf16.msra.mxu0 0
      %386 = vmatprep.subr.bf16.mxu0 0
      %387 = vmatpush2.bf16.msra.mxu0 0
      %388 = vmatprep.mubr.bf16.mxu0 0
      %389 = vmatmul.mubr.bf16.gmra.mxu0 %v219
      %v390 = vpop.f32.mrf.mxu0
      %v391 = vadd.f32 0.0, %v390
      %v392 = vpop.f32.mrf.mxu0
      %v393 = vpop.f32.mrf.mxu0
      %v394 = vadd.f32 0.0, %v393
      %v395 = vpop.f32.mrf.mxu0
      %396 = vmatprep.mubr.bf16.mxu0 0
      %397 = vmatmul.mubr.bf16.gmra.mxu0 %v222
      %v398 = vpop.f32.mrf.mxu0
      %v399 = vadd.f32 0.0, %v398
      %v400 = vpop.f32.mrf.mxu0
      %v401 = vpop.f32.mrf.mxu0
      %v402 = vadd.f32 0.0, %v401
      %v403 = vpop.f32.mrf.mxu0
      %404 = vmatprep.mubr.bf16.mxu0 0
      %405 = vmatmul.mubr.bf16.gmra.mxu0 %v225
      %v406 = vpop.f32.mrf.mxu0
      %v407 = vadd.f32 0.0, %v406
      %v408 = vpop.f32.mrf.mxu0
      %v409 = vpop.f32.mrf.mxu0
      %v410 = vadd.f32 0.0, %v409
      %v411 = vpop.f32.mrf.mxu0
      %412 = vmatprep.mubr.bf16.mxu0 0
      %413 = vmatmul.mubr.bf16.gmra.mxu0 %v228
      %v414 = vpop.f32.mrf.mxu0
      %v415 = vadd.f32 0.0, %v414
      %v416 = vpop.f32.mrf.mxu0
      %v417 = vpop.f32.mrf.mxu0
      %v418 = vadd.f32 0.0, %v417
      %v419 = vpop.f32.mrf.mxu0
      %420 = vmatprep.mubr.bf16.mxu0 0
      %421 = vmatmul.mubr.bf16.gmra.mxu0 %v231
      %v422 = vpop.f32.mrf.mxu0
      %v423 = vadd.f32 0.0, %v422
      %v424 = vpop.f32.mrf.mxu0
      %v425 = vpop.f32.mrf.mxu0
      %v426 = vadd.f32 0.0, %v425
      %v427 = vpop.f32.mrf.mxu0
      %428 = vmatprep.mubr.bf16.mxu0 0
      %429 = vmatmul.mubr.bf16.gmra.mxu0 %v234
      %v430 = vpop.f32.mrf.mxu0
      %v431 = vadd.f32 0.0, %v430
      %v432 = vpop.f32.mrf.mxu0
      %v433 = vpop.f32.mrf.mxu0
      %v434 = vadd.f32 0.0, %v433
      %v435 = vpop.f32.mrf.mxu0
      %436 = vmatprep.mubr.bf16.mxu0 0
      %437 = vmatmul.mubr.bf16.gmra.mxu0 %v237
      %v438 = vpop.f32.mrf.mxu0
      %v439 = vadd.f32 0.0, %v438
      %v440 = vpop.f32.mrf.mxu0
      %v441 = vpop.f32.mrf.mxu0
      %v442 = vadd.f32 0.0, %v441
      %v443 = vpop.f32.mrf.mxu0
      %444 = vmatprep.mubr.bf16.mxu0 0
      %445 = vmatmul.mubr.bf16.gmra.mxu0 %v240
      %v446 = vpop.f32.mrf.mxu0
      %v447 = vadd.f32 0.0, %v446
      %v448 = vpop.f32.mrf.mxu0
      %v449 = vpop.f32.mrf.mxu0
      %v450 = vadd.f32 0.0, %v449
      %v451 = vpop.f32.mrf.mxu0
      %452 = vdwg.mxu0
      %v453 = vpack.c.bf16 %v277, %v277
      %v454 = vpack.c.bf16 %v280, %v280
      %v455 = vpack.c.bf16 %v285, %v285
      %v456 = vpack.c.bf16 %v288, %v288
      %v457 = vpack.c.bf16 %v293, %v293
      %v458 = vpack.c.bf16 %v296, %v296
      %v459 = vpack.c.bf16 %v301, %v301
      %v460 = vpack.c.bf16 %v304, %v304
      %v461 = vpack.c.bf16 %v309, %v309
      %v462 = vpack.c.bf16 %v312, %v312
      %v463 = vpack.c.bf16 %v317, %v317
      %v464 = vpack.c.bf16 %v320, %v320
      %v465 = vpack.c.bf16 %v325, %v325
      %v466 = vpack.c.bf16 %v328, %v328
      %v467 = vpack.c.bf16 %v333, %v333
      %v468 = vpack.c.bf16 %v336, %v336
      %v469 = vpack.c.bf16 %v391, %v391
      %v470 = vpack.c.bf16 %v394, %v394
      %v471 = vpack.c.bf16 %v399, %v399
      %v472 = vpack.c.bf16 %v402, %v402
      %v473 = vpack.c.bf16 %v407, %v407
      %v474 = vpack.c.bf16 %v410, %v410
      %v475 = vpack.c.bf16 %v415, %v415
      %v476 = vpack.c.bf16 %v418, %v418
      %v477 = vpack.c.bf16 %v423, %v423
      %v478 = vpack.c.bf16 %v426, %v426
      %v479 = vpack.c.bf16 %v431, %v431
      %v480 = vpack.c.bf16 %v434, %v434
      %v481 = vpack.c.bf16 %v439, %v439
      %v482 = vpack.c.bf16 %v442, %v442
      %v483 = vpack.c.bf16 %v447, %v447
      %v484 = vpack.c.bf16 %v450, %v450
      %v486 = vsel %vm217, %v453, 0
      %v489 = vsel %vm217, %v469, 0
      %491 = vmatprep.subr.bf16.mxu0 0
      %492 = vmatpush1.bf16.xpose.msra.mxu0 0
      %493 = vmatprep.subr.bf16.mxu0 0
      %494 = vmatpush1.bf16.xpose.msra.mxu0 0
      %495 = vmatprep.subr.bf16.mxu0 0
      %496 = vmatpush1.bf16.xpose.msra.mxu0 0
      %497 = vmatprep.subr.bf16.mxu0 0
      %498 = vmatpush1.bf16.xpose.msra.mxu0 0
      %499 = vmatprep.subr.bf16.mxu0 0
      %500 = vmatpush1.bf16.xpose.msra.mxu0 0
      %501 = vmatprep.subr.bf16.mxu0 0
      %502 = vmatpush1.bf16.xpose.msra.mxu0 0
      %503 = vmatprep.subr.bf16.mxu0 0
      %504 = vmatpush1.bf16.xpose.msra.mxu0 0
      %505 = vmatprep.subr.bf16.mxu0 0
      %506 = vmatpush1.bf16.xpose.msra.mxu0 %v489
      %507 = vmatprep.subr.bf16.mxu0 0
      %508 = vmatpush2.bf16.xpose.msra.mxu0 0
      %509 = vmatprep.subr.bf16.mxu0 0
      %510 = vmatpush2.bf16.xpose.msra.mxu0 0
      %511 = vmatprep.subr.bf16.mxu0 0
      %512 = vmatpush2.bf16.xpose.msra.mxu0 0
      %513 = vmatprep.subr.bf16.mxu0 0
      %514 = vmatpush2.bf16.xpose.msra.mxu0 0
      %515 = vmatprep.subr.bf16.mxu0 0
      %516 = vmatpush2.bf16.xpose.msra.mxu0 0
      %517 = vmatprep.subr.bf16.mxu0 0
      %518 = vmatpush2.bf16.xpose.msra.mxu0 0
      %519 = vmatprep.subr.bf16.mxu0 0
      %520 = vmatpush2.bf16.xpose.msra.mxu0 0
      %521 = vmatprep.subr.bf16.mxu0 0
      %522 = vmatpush2.bf16.xpose.msra.mxu0 0
      %523 = vmatprep.mubr.bf16.mxu0 0
      %524 = vmatmul.mubr.bf16.gmra.mxu0 %v486
      %v525 = vpop.f32.mrf.mxu0
      %v526 = vadd.f32 0.0, %v525
      %v527 = vpop.f32.mrf.mxu0
      %v528 = vpop.f32.mrf.mxu0
      %v529 = vpop.f32.mrf.mxu0
      %530 = vdwg.mxu0
      %v532 = vsel %vm217, %v454, 0
      %v535 = vsel %vm217, %v470, 0
      %537 = vmatprep.subr.bf16.mxu0 0
      %538 = vmatpush1.bf16.xpose.msra.mxu0 0
      %539 = vmatprep.subr.bf16.mxu0 0
      %540 = vmatpush1.bf16.xpose.msra.mxu0 0
      %541 = vmatprep.subr.bf16.mxu0 0
      %542 = vmatpush1.bf16.xpose.msra.mxu0 0
      %543 = vmatprep.subr.bf16.mxu0 0
      %544 = vmatpush1.bf16.xpose.msra.mxu0 0
      %545 = vmatprep.subr.bf16.mxu0 0
      %546 = vmatpush1.bf16.xpose.msra.mxu0 0
      %547 = vmatprep.subr.bf16.mxu0 0
      %548 = vmatpush1.bf16.xpose.msra.mxu0 0
      %549 = vmatprep.subr.bf16.mxu0 0
      %550 = vmatpush1.bf16.xpose.msra.mxu0 0
      %551 = vmatprep.subr.bf16.mxu0 0
      %552 = vmatpush1.bf16.xpose.msra.mxu0 %v535
      %553 = vmatprep.subr.bf16.mxu0 0
      %554 = vmatpush2.bf16.xpose.msra.mxu0 0
      %555 = vmatprep.subr.bf16.mxu0 0
      %556 = vmatpush2.bf16.xpose.msra.mxu0 0
      %557 = vmatprep.subr.bf16.mxu0 0
      %558 = vmatpush2.bf16.xpose.msra.mxu0 0
      %559 = vmatprep.subr.bf16.mxu0 0
      %560 = vmatpush2.bf16.xpose.msra.mxu0 0
      %561 = vmatprep.subr.bf16.mxu0 0
      %562 = vmatpush2.bf16.xpose.msra.mxu0 0
      %563 = vmatprep.subr.bf16.mxu0 0
      %564 = vmatpush2.bf16.xpose.msra.mxu0 0
      %565 = vmatprep.subr.bf16.mxu0 0
      %566 = vmatpush2.bf16.xpose.msra.mxu0 0
      %567 = vmatprep.subr.bf16.mxu0 0
      %568 = vmatpush2.bf16.xpose.msra.mxu0 0
      %569 = vmatprep.mubr.bf16.mxu0 0
      %570 = vmatmul.mubr.bf16.gmra.mxu0 %v532
      %v571 = vpop.f32.mrf.mxu0
      %v572 = vadd.f32 0.0, %v571
      %v573 = vpop.f32.mrf.mxu0
      %v574 = vpop.f32.mrf.mxu0
      %v575 = vpop.f32.mrf.mxu0
      %576 = vdwg.mxu0
      %v578 = vsel %vm217, %v455, 0
      %v581 = vsel %vm217, %v471, 0
      %583 = vmatprep.subr.bf16.mxu0 0
      %584 = vmatpush1.bf16.xpose.msra.mxu0 0
      %585 = vmatprep.subr.bf16.mxu0 0
      %586 = vmatpush1.bf16.xpose.msra.mxu0 0
      %587 = vmatprep.subr.bf16.mxu0 0
      %588 = vmatpush1.bf16.xpose.msra.mxu0 0
      %589 = vmatprep.subr.bf16.mxu0 0
      %590 = vmatpush1.bf16.xpose.msra.mxu0 0
      %591 = vmatprep.subr.bf16.mxu0 0
      %592 = vmatpush1.bf16.xpose.msra.mxu0 0
      %593 = vmatprep.subr.bf16.mxu0 0
      %594 = vmatpush1.bf16.xpose.msra.mxu0 0
      %595 = vmatprep.subr.bf16.mxu0 0
      %596 = vmatpush1.bf16.xpose.msra.mxu0 0
      %597 = vmatprep.subr.bf16.mxu0 0
      %598 = vmatpush1.bf16.xpose.msra.mxu0 %v581
      %599 = vmatprep.subr.bf16.mxu0 0
      %600 = vmatpush2.bf16.xpose.msra.mxu0 0
      %601 = vmatprep.subr.bf16.mxu0 0
      %602 = vmatpush2.bf16.xpose.msra.mxu0 0
      %603 = vmatprep.subr.bf16.mxu0 0
      %604 = vmatpush2.bf16.xpose.msra.mxu0 0
      %605 = vmatprep.subr.bf16.mxu0 0
      %606 = vmatpush2.bf16.xpose.msra.mxu0 0
      %607 = vmatprep.subr.bf16.mxu0 0
      %608 = vmatpush2.bf16.xpose.msra.mxu0 0
      %609 = vmatprep.subr.bf16.mxu0 0
      %610 = vmatpush2.bf16.xpose.msra.mxu0 0
      %611 = vmatprep.subr.bf16.mxu0 0
      %612 = vmatpush2.bf16.xpose.msra.mxu0 0
      %613 = vmatprep.subr.bf16.mxu0 0
      %614 = vmatpush2.bf16.xpose.msra.mxu0 0
      %615 = vmatprep.mubr.bf16.mxu0 0
      %616 = vmatmul.mubr.bf16.gmra.mxu0 %v578
      %v617 = vpop.f32.mrf.mxu0
      %v618 = vadd.f32 0.0, %v617
      %v619 = vpop.f32.mrf.mxu0
      %v620 = vpop.f32.mrf.mxu0
      %v621 = vpop.f32.mrf.mxu0
      %622 = vdwg.mxu0
      %v624 = vsel %vm217, %v456, 0
      %v627 = vsel %vm217, %v472, 0
      %629 = vmatprep.subr.bf16.mxu0 0
      %630 = vmatpush1.bf16.xpose.msra.mxu0 0
      %631 = vmatprep.subr.bf16.mxu0 0
      %632 = vmatpush1.bf16.xpose.msra.mxu0 0
      %633 = vmatprep.subr.bf16.mxu0 0
      %634 = vmatpush1.bf16.xpose.msra.mxu0 0
      %635 = vmatprep.subr.bf16.mxu0 0
      %636 = vmatpush1.bf16.xpose.msra.mxu0 0
      %637 = vmatprep.subr.bf16.mxu0 0
      %638 = vmatpush1.bf16.xpose.msra.mxu0 0
      %639 = vmatprep.subr.bf16.mxu0 0
      %640 = vmatpush1.bf16.xpose.msra.mxu0 0
      %641 = vmatprep.subr.bf16.mxu0 0
      %642 = vmatpush1.bf16.xpose.msra.mxu0 0
      %643 = vmatprep.subr.bf16.mxu0 0
      %644 = vmatpush1.bf16.xpose.msra.mxu0 %v627
      %645 = vmatprep.subr.bf16.mxu0 0
      %646 = vmatpush2.bf16.xpose.msra.mxu0 0
      %647 = vmatprep.subr.bf16.mxu0 0
      %648 = vmatpush2.bf16.xpose.msra.mxu0 0
      %649 = vmatprep.subr.bf16.mxu0 0
      %650 = vmatpush2.bf16.xpose.msra.mxu0 0
      %651 = vmatprep.subr.bf16.mxu0 0
      %652 = vmatpush2.bf16.xpose.msra.mxu0 0
      %653 = vmatprep.subr.bf16.mxu0 0
      %654 = vmatpush2.bf16.xpose.msra.mxu0 0
      %655 = vmatprep.subr.bf16.mxu0 0
      %656 = vmatpush2.bf16.xpose.msra.mxu0 0
      %657 = vmatprep.subr.bf16.mxu0 0
      %658 = vmatpush2.bf16.xpose.msra.mxu0 0
      %659 = vmatprep.subr.bf16.mxu0 0
      %660 = vmatpush2.bf16.xpose.msra.mxu0 0
      %661 = vmatprep.mubr.bf16.mxu0 0
      %662 = vmatmul.mubr.bf16.gmra.mxu0 %v624
      %v663 = vpop.f32.mrf.mxu0
      %v664 = vadd.f32 0.0, %v663
      %v665 = vpop.f32.mrf.mxu0
      %v666 = vpop.f32.mrf.mxu0
      %v667 = vpop.f32.mrf.mxu0
      %668 = vdwg.mxu0
      %v670 = vsel %vm217, %v457, 0
      %v673 = vsel %vm217, %v473, 0
      %675 = vmatprep.subr.bf16.mxu0 0
      %676 = vmatpush1.bf16.xpose.msra.mxu0 0
      %677 = vmatprep.subr.bf16.mxu0 0
      %678 = vmatpush1.bf16.xpose.msra.mxu0 0
      %679 = vmatprep.subr.bf16.mxu0 0
      %680 = vmatpush1.bf16.xpose.msra.mxu0 0
      %681 = vmatprep.subr.bf16.mxu0 0
      %682 = vmatpush1.bf16.xpose.msra.mxu0 0
      %683 = vmatprep.subr.bf16.mxu0 0
      %684 = vmatpush1.bf16.xpose.msra.mxu0 0
      %685 = vmatprep.subr.bf16.mxu0 0
      %686 = vmatpush1.bf16.xpose.msra.mxu0 0
      %687 = vmatprep.subr.bf16.mxu0 0
      %688 = vmatpush1.bf16.xpose.msra.mxu0 0
      %689 = vmatprep.subr.bf16.mxu0 0
      %690 = vmatpush1.bf16.xpose.msra.mxu0 %v673
      %691 = vmatprep.subr.bf16.mxu0 0
      %692 = vmatpush2.bf16.xpose.msra.mxu0 0
      %693 = vmatprep.subr.bf16.mxu0 0
      %694 = vmatpush2.bf16.xpose.msra.mxu0 0
      %695 = vmatprep.subr.bf16.mxu0 0
      %696 = vmatpush2.bf16.xpose.msra.mxu0 0
      %697 = vmatprep.subr.bf16.mxu0 0
      %698 = vmatpush2.bf16.xpose.msra.mxu0 0
      %699 = vmatprep.subr.bf16.mxu0 0
      %700 = vmatpush2.bf16.xpose.msra.mxu0 0
      %701 = vmatprep.subr.bf16.mxu0 0
      %702 = vmatpush2.bf16.xpose.msra.mxu0 0
      %703 = vmatprep.subr.bf16.mxu0 0
      %704 = vmatpush2.bf16.xpose.msra.mxu0 0
      %705 = vmatprep.subr.bf16.mxu0 0
      %706 = vmatpush2.bf16.xpose.msra.mxu0 0
      %707 = vmatprep.mubr.bf16.mxu0 0
      %708 = vmatmul.mubr.bf16.gmra.mxu0 %v670
      %v709 = vpop.f32.mrf.mxu0
      %v710 = vadd.f32 0.0, %v709
      %v711 = vpop.f32.mrf.mxu0
      %v712 = vpop.f32.mrf.mxu0
      %v713 = vpop.f32.mrf.mxu0
      %714 = vdwg.mxu0
      %v716 = vsel %vm217, %v458, 0
      %v719 = vsel %vm217, %v474, 0
      %721 = vmatprep.subr.bf16.mxu0 0
      %722 = vmatpush1.bf16.xpose.msra.mxu0 0
      %723 = vmatprep.subr.bf16.mxu0 0
      %724 = vmatpush1.bf16.xpose.msra.mxu0 0
      %725 = vmatprep.subr.bf16.mxu0 0
      %726 = vmatpush1.bf16.xpose.msra.mxu0 0
      %727 = vmatprep.subr.bf16.mxu0 0
      %728 = vmatpush1.bf16.xpose.msra.mxu0 0
      %729 = vmatprep.subr.bf16.mxu0 0
      %730 = vmatpush1.bf16.xpose.msra.mxu0 0
      %731 = vmatprep.subr.bf16.mxu0 0
      %732 = vmatpush1.bf16.xpose.msra.mxu0 0
      %733 = vmatprep.subr.bf16.mxu0 0
      %734 = vmatpush1.bf16.xpose.msra.mxu0 0
      %735 = vmatprep.subr.bf16.mxu0 0
      %736 = vmatpush1.bf16.xpose.msra.mxu0 %v719
      %737 = vmatprep.subr.bf16.mxu0 0
      %738 = vmatpush2.bf16.xpose.msra.mxu0 0
      %739 = vmatprep.subr.bf16.mxu0 0
      %740 = vmatpush2.bf16.xpose.msra.mxu0 0
      %741 = vmatprep.subr.bf16.mxu0 0
      %742 = vmatpush2.bf16.xpose.msra.mxu0 0
      %743 = vmatprep.subr.bf16.mxu0 0
      %744 = vmatpush2.bf16.xpose.msra.mxu0 0
      %745 = vmatprep.subr.bf16.mxu0 0
      %746 = vmatpush2.bf16.xpose.msra.mxu0 0
      %747 = vmatprep.subr.bf16.mxu0 0
      %748 = vmatpush2.bf16.xpose.msra.mxu0 0
      %749 = vmatprep.subr.bf16.mxu0 0
      %750 = vmatpush2.bf16.xpose.msra.mxu0 0
      %751 = vmatprep.subr.bf16.mxu0 0
      %752 = vmatpush2.bf16.xpose.msra.mxu0 0
      %753 = vmatprep.mubr.bf16.mxu0 0
      %754 = vmatmul.mubr.bf16.gmra.mxu0 %v716
      %v755 = vpop.f32.mrf.mxu0
      %v756 = vadd.f32 0.0, %v755
      %v757 = vpop.f32.mrf.mxu0
      %v758 = vpop.f32.mrf.mxu0
      %v759 = vpop.f32.mrf.mxu0
      %760 = vdwg.mxu0
      %v762 = vsel %vm217, %v459, 0
      %v765 = vsel %vm217, %v475, 0
      %767 = vmatprep.subr.bf16.mxu0 0
      %768 = vmatpush1.bf16.xpose.msra.mxu0 0
      %769 = vmatprep.subr.bf16.mxu0 0
      %770 = vmatpush1.bf16.xpose.msra.mxu0 0
      %771 = vmatprep.subr.bf16.mxu0 0
      %772 = vmatpush1.bf16.xpose.msra.mxu0 0
      %773 = vmatprep.subr.bf16.mxu0 0
      %774 = vmatpush1.bf16.xpose.msra.mxu0 0
      %775 = vmatprep.subr.bf16.mxu0 0
      %776 = vmatpush1.bf16.xpose.msra.mxu0 0
      %777 = vmatprep.subr.bf16.mxu0 0
      %778 = vmatpush1.bf16.xpose.msra.mxu0 0
      %779 = vmatprep.subr.bf16.mxu0 0
      %780 = vmatpush1.bf16.xpose.msra.mxu0 0
      %781 = vmatprep.subr.bf16.mxu0 0
      %782 = vmatpush1.bf16.xpose.msra.mxu0 %v765
      %783 = vmatprep.subr.bf16.mxu0 0
      %784 = vmatpush2.bf16.xpose.msra.mxu0 0
      %785 = vmatprep.subr.bf16.mxu0 0
      %786 = vmatpush2.bf16.xpose.msra.mxu0 0
      %787 = vmatprep.subr.bf16.mxu0 0
      %788 = vmatpush2.bf16.xpose.msra.mxu0 0
      %789 = vmatprep.subr.bf16.mxu0 0
      %790 = vmatpush2.bf16.xpose.msra.mxu0 0
      %791 = vmatprep.subr.bf16.mxu0 0
      %792 = vmatpush2.bf16.xpose.msra.mxu0 0
      %793 = vmatprep.subr.bf16.mxu0 0
      %794 = vmatpush2.bf16.xpose.msra.mxu0 0
      %795 = vmatprep.subr.bf16.mxu0 0
      %796 = vmatpush2.bf16.xpose.msra.mxu0 0
      %797 = vmatprep.subr.bf16.mxu0 0
      %798 = vmatpush2.bf16.xpose.msra.mxu0 0
      %799 = vmatprep.mubr.bf16.mxu0 0
      %800 = vmatmul.mubr.bf16.gmra.mxu0 %v762
      %v801 = vpop.f32.mrf.mxu0
      %v802 = vadd.f32 0.0, %v801
      %v803 = vpop.f32.mrf.mxu0
      %v804 = vpop.f32.mrf.mxu0
      %v805 = vpop.f32.mrf.mxu0
      %806 = vdwg.mxu0
      %v808 = vsel %vm217, %v460, 0
      %v811 = vsel %vm217, %v476, 0
      %813 = vmatprep.subr.bf16.mxu0 0
      %814 = vmatpush1.bf16.xpose.msra.mxu0 0
      %815 = vmatprep.subr.bf16.mxu0 0
      %816 = vmatpush1.bf16.xpose.msra.mxu0 0
      %817 = vmatprep.subr.bf16.mxu0 0
      %818 = vmatpush1.bf16.xpose.msra.mxu0 0
      %819 = vmatprep.subr.bf16.mxu0 0
      %820 = vmatpush1.bf16.xpose.msra.mxu0 0
      %821 = vmatprep.subr.bf16.mxu0 0
      %822 = vmatpush1.bf16.xpose.msra.mxu0 0
      %823 = vmatprep.subr.bf16.mxu0 0
      %824 = vmatpush1.bf16.xpose.msra.mxu0 0
      %825 = vmatprep.subr.bf16.mxu0 0
      %826 = vmatpush1.bf16.xpose.msra.mxu0 0
      %827 = vmatprep.subr.bf16.mxu0 0
      %828 = vmatpush1.bf16.xpose.msra.mxu0 %v811
      %829 = vmatprep.subr.bf16.mxu0 0
      %830 = vmatpush2.bf16.xpose.msra.mxu0 0
      %831 = vmatprep.subr.bf16.mxu0 0
      %832 = vmatpush2.bf16.xpose.msra.mxu0 0
      %833 = vmatprep.subr.bf16.mxu0 0
      %834 = vmatpush2.bf16.xpose.msra.mxu0 0
      %835 = vmatprep.subr.bf16.mxu0 0
      %836 = vmatpush2.bf16.xpose.msra.mxu0 0
      %837 = vmatprep.subr.bf16.mxu0 0
      %838 = vmatpush2.bf16.xpose.msra.mxu0 0
      %839 = vmatprep.subr.bf16.mxu0 0
      %840 = vmatpush2.bf16.xpose.msra.mxu0 0
      %841 = vmatprep.subr.bf16.mxu0 0
      %842 = vmatpush2.bf16.xpose.msra.mxu0 0
      %843 = vmatprep.subr.bf16.mxu0 0
      %844 = vmatpush2.bf16.xpose.msra.mxu0 0
      %845 = vmatprep.mubr.bf16.mxu0 0
      %846 = vmatmul.mubr.bf16.gmra.mxu0 %v808
      %v847 = vpop.f32.mrf.mxu0
      %v848 = vadd.f32 0.0, %v847
      %v849 = vpop.f32.mrf.mxu0
      %v850 = vpop.f32.mrf.mxu0
      %v851 = vpop.f32.mrf.mxu0
      %852 = vdwg.mxu0
      %v854 = vsel %vm217, %v461, 0
      %v857 = vsel %vm217, %v477, 0
      %859 = vmatprep.subr.bf16.mxu0 0
      %860 = vmatpush1.bf16.xpose.msra.mxu0 0
      %861 = vmatprep.subr.bf16.mxu0 0
      %862 = vmatpush1.bf16.xpose.msra.mxu0 0
      %863 = vmatprep.subr.bf16.mxu0 0
      %864 = vmatpush1.bf16.xpose.msra.mxu0 0
      %865 = vmatprep.subr.bf16.mxu0 0
      %866 = vmatpush1.bf16.xpose.msra.mxu0 0
      %867 = vmatprep.subr.bf16.mxu0 0
      %868 = vmatpush1.bf16.xpose.msra.mxu0 0
      %869 = vmatprep.subr.bf16.mxu0 0
      %870 = vmatpush1.bf16.xpose.msra.mxu0 0
      %871 = vmatprep.subr.bf16.mxu0 0
      %872 = vmatpush1.bf16.xpose.msra.mxu0 0
      %873 = vmatprep.subr.bf16.mxu0 0
      %874 = vmatpush1.bf16.xpose.msra.mxu0 %v857
      %875 = vmatprep.subr.bf16.mxu0 0
      %876 = vmatpush2.bf16.xpose.msra.mxu0 0
      %877 = vmatprep.subr.bf16.mxu0 0
      %878 = vmatpush2.bf16.xpose.msra.mxu0 0
      %879 = vmatprep.subr.bf16.mxu0 0
      %880 = vmatpush2.bf16.xpose.msra.mxu0 0
      %881 = vmatprep.subr.bf16.mxu0 0
      %882 = vmatpush2.bf16.xpose.msra.mxu0 0
      %883 = vmatprep.subr.bf16.mxu0 0
      %884 = vmatpush2.bf16.xpose.msra.mxu0 0
      %885 = vmatprep.subr.bf16.mxu0 0
      %886 = vmatpush2.bf16.xpose.msra.mxu0 0
      %887 = vmatprep.subr.bf16.mxu0 0
      %888 = vmatpush2.bf16.xpose.msra.mxu0 0
      %889 = vmatprep.subr.bf16.mxu0 0
      %890 = vmatpush2.bf16.xpose.msra.mxu0 0
      %891 = vmatprep.mubr.bf16.mxu0 0
      %892 = vmatmul.mubr.bf16.gmra.mxu0 %v854
      %v893 = vpop.f32.mrf.mxu0
      %v894 = vadd.f32 0.0, %v893
      %v895 = vpop.f32.mrf.mxu0
      %v896 = vpop.f32.mrf.mxu0
      %v897 = vpop.f32.mrf.mxu0
      %898 = vdwg.mxu0
      %v900 = vsel %vm217, %v462, 0
      %v903 = vsel %vm217, %v478, 0
      %905 = vmatprep.subr.bf16.mxu0 0
      %906 = vmatpush1.bf16.xpose.msra.mxu0 0
      %907 = vmatprep.subr.bf16.mxu0 0
      %908 = vmatpush1.bf16.xpose.msra.mxu0 0
      %909 = vmatprep.subr.bf16.mxu0 0
      %910 = vmatpush1.bf16.xpose.msra.mxu0 0
      %911 = vmatprep.subr.bf16.mxu0 0
      %912 = vmatpush1.bf16.xpose.msra.mxu0 0
      %913 = vmatprep.subr.bf16.mxu0 0
      %914 = vmatpush1.bf16.xpose.msra.mxu0 0
      %915 = vmatprep.subr.bf16.mxu0 0
      %916 = vmatpush1.bf16.xpose.msra.mxu0 0
      %917 = vmatprep.subr.bf16.mxu0 0
      %918 = vmatpush1.bf16.xpose.msra.mxu0 0
      %919 = vmatprep.subr.bf16.mxu0 0
      %920 = vmatpush1.bf16.xpose.msra.mxu0 %v903
      %921 = vmatprep.subr.bf16.mxu0 0
      %922 = vmatpush2.bf16.xpose.msra.mxu0 0
      %923 = vmatprep.subr.bf16.mxu0 0
      %924 = vmatpush2.bf16.xpose.msra.mxu0 0
      %925 = vmatprep.subr.bf16.mxu0 0
      %926 = vmatpush2.bf16.xpose.msra.mxu0 0
      %927 = vmatprep.subr.bf16.mxu0 0
      %928 = vmatpush2.bf16.xpose.msra.mxu0 0
      %929 = vmatprep.subr.bf16.mxu0 0
      %930 = vmatpush2.bf16.xpose.msra.mxu0 0
      %931 = vmatprep.subr.bf16.mxu0 0
      %932 = vmatpush2.bf16.xpose.msra.mxu0 0
      %933 = vmatprep.subr.bf16.mxu0 0
      %934 = vmatpush2.bf16.xpose.msra.mxu0 0
      %935 = vmatprep.subr.bf16.mxu0 0
      %936 = vmatpush2.bf16.xpose.msra.mxu0 0
      %937 = vmatprep.mubr.bf16.mxu0 0
      %938 = vmatmul.mubr.bf16.gmra.mxu0 %v900
      %v939 = vpop.f32.mrf.mxu0
      %v940 = vadd.f32 0.0, %v939
      %v941 = vpop.f32.mrf.mxu0
      %v942 = vpop.f32.mrf.mxu0
      %v943 = vpop.f32.mrf.mxu0
      %944 = vdwg.mxu0
      %v946 = vsel %vm217, %v463, 0
      %v949 = vsel %vm217, %v479, 0
      %951 = vmatprep.subr.bf16.mxu0 0
      %952 = vmatpush1.bf16.xpose.msra.mxu0 0
      %953 = vmatprep.subr.bf16.mxu0 0
      %954 = vmatpush1.bf16.xpose.msra.mxu0 0
      %955 = vmatprep.subr.bf16.mxu0 0
      %956 = vmatpush1.bf16.xpose.msra.mxu0 0
      %957 = vmatprep.subr.bf16.mxu0 0
      %958 = vmatpush1.bf16.xpose.msra.mxu0 0
      %959 = vmatprep.subr.bf16.mxu0 0
      %960 = vmatpush1.bf16.xpose.msra.mxu0 0
      %961 = vmatprep.subr.bf16.mxu0 0
      %962 = vmatpush1.bf16.xpose.msra.mxu0 0
      %963 = vmatprep.subr.bf16.mxu0 0
      %964 = vmatpush1.bf16.xpose.msra.mxu0 0
      %965 = vmatprep.subr.bf16.mxu0 0
      %966 = vmatpush1.bf16.xpose.msra.mxu0 %v949
      %967 = vmatprep.subr.bf16.mxu0 0
      %968 = vmatpush2.bf16.xpose.msra.mxu0 0
      %969 = vmatprep.subr.bf16.mxu0 0
      %970 = vmatpush2.bf16.xpose.msra.mxu0 0
      %971 = vmatprep.subr.bf16.mxu0 0
      %972 = vmatpush2.bf16.xpose.msra.mxu0 0
      %973 = vmatprep.subr.bf16.mxu0 0
      %974 = vmatpush2.bf16.xpose.msra.mxu0 0
      %975 = vmatprep.subr.bf16.mxu0 0
      %976 = vmatpush2.bf16.xpose.msra.mxu0 0
      %977 = vmatprep.subr.bf16.mxu0 0
      %978 = vmatpush2.bf16.xpose.msra.mxu0 0
      %979 = vmatprep.subr.bf16.mxu0 0
      %980 = vmatpush2.bf16.xpose.msra.mxu0 0
      %981 = vmatprep.subr.bf16.mxu0 0
      %982 = vmatpush2.bf16.xpose.msra.mxu0 0
      %983 = vmatprep.mubr.bf16.mxu0 0
      %984 = vmatmul.mubr.bf16.gmra.mxu0 %v946
      %v985 = vpop.f32.mrf.mxu0
      %v986 = vadd.f32 0.0, %v985
      %v987 = vpop.f32.mrf.mxu0
      %v988 = vpop.f32.mrf.mxu0
      %v989 = vpop.f32.mrf.mxu0
      %990 = vdwg.mxu0
      %v992 = vsel %vm217, %v464, 0
      %v995 = vsel %vm217, %v480, 0
      %997 = vmatprep.subr.bf16.mxu0 0
      %998 = vmatpush1.bf16.xpose.msra.mxu0 0
      %999 = vmatprep.subr.bf16.mxu0 0
      %1000 = vmatpush1.bf16.xpose.msra.mxu0 0
      %1001 = vmatprep.subr.bf16.mxu0 0
      %1002 = vmatpush1.bf16.xpose.msra.mxu0 0
      %1003 = vmatprep.subr.bf16.mxu0 0
      %1004 = vmatpush1.bf16.xpose.msra.mxu0 0
      %1005 = vmatprep.subr.bf16.mxu0 0
      %1006 = vmatpush1.bf16.xpose.msra.mxu0 0
      %1007 = vmatprep.subr.bf16.mxu0 0
      %1008 = vmatpush1.bf16.xpose.msra.mxu0 0
      %1009 = vmatprep.subr.bf16.mxu0 0
      %1010 = vmatpush1.bf16.xpose.msra.mxu0 0
      %1011 = vmatprep.subr.bf16.mxu0 0
      %1012 = vmatpush1.bf16.xpose.msra.mxu0 %v995
      %1013 = vmatprep.subr.bf16.mxu0 0
      %1014 = vmatpush2.bf16.xpose.msra.mxu0 0
      %1015 = vmatprep.subr.bf16.mxu0 0
      %1016 = vmatpush2.bf16.xpose.msra.mxu0 0
      %1017 = vmatprep.subr.bf16.mxu0 0
      %1018 = vmatpush2.bf16.xpose.msra.mxu0 0
      %1019 = vmatprep.subr.bf16.mxu0 0
      %1020 = vmatpush2.bf16.xpose.msra.mxu0 0
      %1021 = vmatprep.subr.bf16.mxu0 0
      %1022 = vmatpush2.bf16.xpose.msra.mxu0 0
      %1023 = vmatprep.subr.bf16.mxu0 0
      %1024 = vmatpush2.bf16.xpose.msra.mxu0 0
      %1025 = vmatprep.subr.bf16.mxu0 0
      %1026 = vmatpush2.bf16.xpose.msra.mxu0 0
      %1027 = vmatprep.subr.bf16.mxu0 0
      %1028 = vmatpush2.bf16.xpose.msra.mxu0 0
      %1029 = vmatprep.mubr.bf16.mxu0 0
      %1030 = vmatmul.mubr.bf16.gmra.mxu0 %v992
      %v1031 = vpop.f32.mrf.mxu0
      %v1032 = vadd.f32 0.0, %v1031
      %v1033 = vpop.f32.mrf.mxu0
      %v1034 = vpop.f32.mrf.mxu0
      %v1035 = vpop.f32.mrf.mxu0
      %1036 = vdwg.mxu0
      %v1038 = vsel %vm217, %v465, 0
      %v1041 = vsel %vm217, %v481, 0
      %1043 = vmatprep.subr.bf16.mxu0 0
      %1044 = vmatpush1.bf16.xpose.msra.mxu0 0
      %1045 = vmatprep.subr.bf16.mxu0 0
      %1046 = vmatpush1.bf16.xpose.msra.mxu0 0
      %1047 = vmatprep.subr.bf16.mxu0 0
      %1048 = vmatpush1.bf16.xpose.msra.mxu0 0
      %1049 = vmatprep.subr.bf16.mxu0 0
      %1050 = vmatpush1.bf16.xpose.msra.mxu0 0
      %1051 = vmatprep.subr.bf16.mxu0 0
      %1052 = vmatpush1.bf16.xpose.msra.mxu0 0
      %1053 = vmatprep.subr.bf16.mxu0 0
      %1054 = vmatpush1.bf16.xpose.msra.mxu0 0
      %1055 = vmatprep.subr.bf16.mxu0 0
      %1056 = vmatpush1.bf16.xpose.msra.mxu0 0
      %1057 = vmatprep.subr.bf16.mxu0 0
      %1058 = vmatpush1.bf16.xpose.msra.mxu0 %v1041
      %1059 = vmatprep.subr.bf16.mxu0 0
      %1060 = vmatpush2.bf16.xpose.msra.mxu0 0
      %1061 = vmatprep.subr.bf16.mxu0 0
      %1062 = vmatpush2.bf16.xpose.msra.mxu0 0
      %1063 = vmatprep.subr.bf16.mxu0 0
      %1064 = vmatpush2.bf16.xpose.msra.mxu0 0
      %1065 = vmatprep.subr.bf16.mxu0 0
      %1066 = vmatpush2.bf16.xpose.msra.mxu0 0
      %1067 = vmatprep.subr.bf16.mxu0 0
      %1068 = vmatpush2.bf16.xpose.msra.mxu0 0
      %1069 = vmatprep.subr.bf16.mxu0 0
      %1070 = vmatpush2.bf16.xpose.msra.mxu0 0
      %1071 = vmatprep.subr.bf16.mxu0 0
      %1072 = vmatpush2.bf16.xpose.msra.mxu0 0
      %1073 = vmatprep.subr.bf16.mxu0 0
      %1074 = vmatpush2.bf16.xpose.msra.mxu0 0
      %1075 = vmatprep.mubr.bf16.mxu0 0
      %1076 = vmatmul.mubr.bf16.gmra.mxu0 %v1038
      %v1077 = vpop.f32.mrf.mxu0
      %v1078 = vadd.f32 0.0, %v1077
      %v1079 = vpop.f32.mrf.mxu0
      %v1080 = vpop.f32.mrf.mxu0
      %v1081 = vpop.f32.mrf.mxu0
      %1082 = vdwg.mxu0
      %v1084 = vsel %vm217, %v466, 0
      %v1087 = vsel %vm217, %v482, 0
      %1089 = vmatprep.subr.bf16.mxu0 0
      %1090 = vmatpush1.bf16.xpose.msra.mxu0 0
      %1091 = vmatprep.subr.bf16.mxu0 0
      %1092 = vmatpush1.bf16.xpose.msra.mxu0 0
      %1093 = vmatprep.subr.bf16.mxu0 0
      %1094 = vmatpush1.bf16.xpose.msra.mxu0 0
      %1095 = vmatprep.subr.bf16.mxu0 0
      %1096 = vmatpush1.bf16.xpose.msra.mxu0 0
      %1097 = vmatprep.subr.bf16.mxu0 0
      %1098 = vmatpush1.bf16.xpose.msra.mxu0 0
      %1099 = vmatprep.subr.bf16.mxu0 0
      %1100 = vmatpush1.bf16.xpose.msra.mxu0 0
      %1101 = vmatprep.subr.bf16.mxu0 0
      %1102 = vmatpush1.bf16.xpose.msra.mxu0 0
      %1103 = vmatprep.subr.bf16.mxu0 0
      %1104 = vmatpush1.bf16.xpose.msra.mxu0 %v1087
      %1105 = vmatprep.subr.bf16.mxu0 0
      %1106 = vmatpush2.bf16.xpose.msra.mxu0 0
      %1107 = vmatprep.subr.bf16.mxu0 0
      %1108 = vmatpush2.bf16.xpose.msra.mxu0 0
      %1109 = vmatprep.subr.bf16.mxu0 0
      %1110 = vmatpush2.bf16.xpose.msra.mxu0 0
      %1111 = vmatprep.subr.bf16.mxu0 0
      %1112 = vmatpush2.bf16.xpose.msra.mxu0 0
      %1113 = vmatprep.subr.bf16.mxu0 0
      %1114 = vmatpush2.bf16.xpose.msra.mxu0 0
      %1115 = vmatprep.subr.bf16.mxu0 0
      %1116 = vmatpush2.bf16.xpose.msra.mxu0 0
      %1117 = vmatprep.subr.bf16.mxu0 0
      %1118 = vmatpush2.bf16.xpose.msra.mxu0 0
      %1119 = vmatprep.subr.bf16.mxu0 0
      %1120 = vmatpush2.bf16.xpose.msra.mxu0 0
      %1121 = vmatprep.mubr.bf16.mxu0 0
      %1122 = vmatmul.mubr.bf16.gmra.mxu0 %v1084
      %v1123 = vpop.f32.mrf.mxu0
      %v1124 = vadd.f32 0.0, %v1123
      %v1125 = vpop.f32.mrf.mxu0
      %v1126 = vpop.f32.mrf.mxu0
      %v1127 = vpop.f32.mrf.mxu0
      %1128 = vdwg.mxu0
      %v1130 = vsel %vm217, %v467, 0
      %v1133 = vsel %vm217, %v483, 0
      %1135 = vmatprep.subr.bf16.mxu0 0
      %1136 = vmatpush1.bf16.xpose.msra.mxu0 0
      %1137 = vmatprep.subr.bf16.mxu0 0
      %1138 = vmatpush1.bf16.xpose.msra.mxu0 0
      %1139 = vmatprep.subr.bf16.mxu0 0
      %1140 = vmatpush1.bf16.xpose.msra.mxu0 0
      %1141 = vmatprep.subr.bf16.mxu0 0
      %1142 = vmatpush1.bf16.xpose.msra.mxu0 0
      %1143 = vmatprep.subr.bf16.mxu0 0
      %1144 = vmatpush1.bf16.xpose.msra.mxu0 0
      %1145 = vmatprep.subr.bf16.mxu0 0
      %1146 = vmatpush1.bf16.xpose.msra.mxu0 0
      %1147 = vmatprep.subr.bf16.mxu0 0
      %1148 = vmatpush1.bf16.xpose.msra.mxu0 0
      %1149 = vmatprep.subr.bf16.mxu0 0
      %1150 = vmatpush1.bf16.xpose.msra.mxu0 %v1133
      %1151 = vmatprep.subr.bf16.mxu0 0
      %1152 = vmatpush2.bf16.xpose.msra.mxu0 0
      %1153 = vmatprep.subr.bf16.mxu0 0
      %1154 = vmatpush2.bf16.xpose.msra.mxu0 0
      %1155 = vmatprep.subr.bf16.mxu0 0
      %1156 = vmatpush2.bf16.xpose.msra.mxu0 0
      %1157 = vmatprep.subr.bf16.mxu0 0
      %1158 = vmatpush2.bf16.xpose.msra.mxu0 0
      %1159 = vmatprep.subr.bf16.mxu0 0
      %1160 = vmatpush2.bf16.xpose.msra.mxu0 0
      %1161 = vmatprep.subr.bf16.mxu0 0
      %1162 = vmatpush2.bf16.xpose.msra.mxu0 0
      %1163 = vmatprep.subr.bf16.mxu0 0
      %1164 = vmatpush2.bf16.xpose.msra.mxu0 0
      %1165 = vmatprep.subr.bf16.mxu0 0
      %1166 = vmatpush2.bf16.xpose.msra.mxu0 0
      %1167 = vmatprep.mubr.bf16.mxu0 0
      %1168 = vmatmul.mubr.bf16.gmra.mxu0 %v1130
      %v1169 = vpop.f32.mrf.mxu0
      %v1170 = vadd.f32 0.0, %v1169
      %v1171 = vpop.f32.mrf.mxu0
      %v1172 = vpop.f32.mrf.mxu0
      %v1173 = vpop.f32.mrf.mxu0
      %1174 = vdwg.mxu0
      %v1176 = vsel %vm217, %v468, 0
      %v1179 = vsel %vm217, %v484, 0
      %1181 = vmatprep.subr.bf16.mxu0 0
      %1182 = vmatpush1.bf16.xpose.msra.mxu0 0
      %1183 = vmatprep.subr.bf16.mxu0 0
      %1184 = vmatpush1.bf16.xpose.msra.mxu0 0
      %1185 = vmatprep.subr.bf16.mxu0 0
      %1186 = vmatpush1.bf16.xpose.msra.mxu0 0
      %1187 = vmatprep.subr.bf16.mxu0 0
      %1188 = vmatpush1.bf16.xpose.msra.mxu0 0
      %1189 = vmatprep.subr.bf16.mxu0 0
      %1190 = vmatpush1.bf16.xpose.msra.mxu0 0
      %1191 = vmatprep.subr.bf16.mxu0 0
      %1192 = vmatpush1.bf16.xpose.msra.mxu0 0
      %1193 = vmatprep.subr.bf16.mxu0 0
      %1194 = vmatpush1.bf16.xpose.msra.mxu0 0
      %1195 = vmatprep.subr.bf16.mxu0 0
      %1196 = vmatpush1.bf16.xpose.msra.mxu0 %v1179
      %1197 = vmatprep.subr.bf16.mxu0 0
      %1198 = vmatpush2.bf16.xpose.msra.mxu0 0
      %1199 = vmatprep.subr.bf16.mxu0 0
      %1200 = vmatpush2.bf16.xpose.msra.mxu0 0
      %1201 = vmatprep.subr.bf16.mxu0 0
      %1202 = vmatpush2.bf16.xpose.msra.mxu0 0
      %1203 = vmatprep.subr.bf16.mxu0 0
      %1204 = vmatpush2.bf16.xpose.msra.mxu0 0
      %1205 = vmatprep.subr.bf16.mxu0 0
      %1206 = vmatpush2.bf16.xpose.msra.mxu0 0
      %1207 = vmatprep.subr.bf16.mxu0 0
      %1208 = vmatpush2.bf16.xpose.msra.mxu0 0
      %1209 = vmatprep.subr.bf16.mxu0 0
      %1210 = vmatpush2.bf16.xpose.msra.mxu0 0
      %1211 = vmatprep.subr.bf16.mxu0 0
      %1212 = vmatpush2.bf16.xpose.msra.mxu0 0
      %1213 = vmatprep.mubr.bf16.mxu0 0
      %1214 = vmatmul.mubr.bf16.gmra.mxu0 %v1176
      %v1215 = vpop.f32.mrf.mxu0
      %v1216 = vadd.f32 0.0, %v1215
      %v1217 = vpop.f32.mrf.mxu0
      %v1218 = vpop.f32.mrf.mxu0
      %v1219 = vpop.f32.mrf.mxu0
      %1220 = vdwg.mxu0
      %vm1221 = vcmask 64512
      %v1222 = vsel %vm1221, %v526, -inf
      %1223 = vmax.xlane.f32.xlu0 %v1222
      %v1224 = vpop.xlane.xlu0 %1223
      %v1225 = vsel %vm1221, %v572, -inf
      %1226 = vmax.xlane.f32.xlu0 %v1225
      %v1227 = vpop.xlane.xlu0 %1226
      %v1228 = vsel %vm1221, %v618, -inf
      %1229 = vmax.xlane.f32.xlu0 %v1228
      %v1230 = vpop.xlane.xlu0 %1229
      %v1231 = vsel %vm1221, %v664, -inf
      %1232 = vmax.xlane.f32.xlu0 %v1231
      %v1233 = vpop.xlane.xlu0 %1232
      %v1234 = vsel %vm1221, %v710, -inf
      %1235 = vmax.xlane.f32.xlu0 %v1234
      %v1236 = vpop.xlane.xlu0 %1235
      %v1237 = vsel %vm1221, %v756, -inf
      %1238 = vmax.xlane.f32.xlu0 %v1237
      %v1239 = vpop.xlane.xlu0 %1238
      %v1240 = vsel %vm1221, %v802, -inf
      %1241 = vmax.xlane.f32.xlu0 %v1240
      %v1242 = vpop.xlane.xlu0 %1241
      %v1243 = vsel %vm1221, %v848, -inf
      %1244 = vmax.xlane.f32.xlu0 %v1243
      %v1245 = vpop.xlane.xlu0 %1244
      %v1246 = vsel %vm1221, %v894, -inf
      %1247 = vmax.xlane.f32.xlu0 %v1246
      %v1248 = vpop.xlane.xlu0 %1247
      %v1249 = vsel %vm1221, %v940, -inf
      %1250 = vmax.xlane.f32.xlu0 %v1249
      %v1251 = vpop.xlane.xlu0 %1250
      %v1252 = vsel %vm1221, %v986, -inf
      %1253 = vmax.xlane.f32.xlu0 %v1252
      %v1254 = vpop.xlane.xlu0 %1253
      %v1255 = vsel %vm1221, %v1032, -inf
      %1256 = vmax.xlane.f32.xlu0 %v1255
      %v1257 = vpop.xlane.xlu0 %1256
      %v1258 = vsel %vm1221, %v1078, -inf
      %1259 = vmax.xlane.f32.xlu0 %v1258
      %v1260 = vpop.xlane.xlu0 %1259
      %v1261 = vsel %vm1221, %v1124, -inf
      %1262 = vmax.xlane.f32.xlu0 %v1261
      %v1263 = vpop.xlane.xlu0 %1262
      %v1264 = vsel %vm1221, %v1170, -inf
      %1265 = vmax.xlane.f32.xlu0 %v1264
      %v1266 = vpop.xlane.xlu0 %1265
      %v1267 = vsel %vm1221, %v1216, -inf
      %1268 = vmax.xlane.f32.xlu0 %v1267
      %v1269 = vpop.xlane.xlu0 %1268
      %v1270 = vsub.f32 %v526, %v1224
      %v1271 = vsub.f32 %v572, %v1227
      %v1272 = vsub.f32 %v618, %v1230
      %v1273 = vsub.f32 %v664, %v1233
      %v1274 = vsub.f32 %v710, %v1236
      %v1275 = vsub.f32 %v756, %v1239
      %v1276 = vsub.f32 %v802, %v1242
      %v1277 = vsub.f32 %v848, %v1245
      %v1278 = vsub.f32 %v894, %v1248
      %v1279 = vsub.f32 %v940, %v1251
      %v1280 = vsub.f32 %v986, %v1254
      %v1281 = vsub.f32 %v1032, %v1257
      %v1282 = vsub.f32 %v1078, %v1260
      %v1283 = vsub.f32 %v1124, %v1263
      %v1284 = vsub.f32 %v1170, %v1266
      %v1285 = vsub.f32 %v1216, %v1269
      %v1286 = vmul.f32 %v1270, 1.442695
      %v1287 = vpow.pop %v1286
      %v1288 = vmul.f32 %v1271, 1.442695
      %v1289 = vpow.pop %v1288
      %v1290 = vmul.f32 %v1272, 1.442695
      %v1291 = vpow.pop %v1290
      %v1292 = vmul.f32 %v1273, 1.442695
      %v1293 = vpow.pop %v1292
      %v1294 = vmul.f32 %v1274, 1.442695
      %v1295 = vpow.pop %v1294
      %v1296 = vmul.f32 %v1275, 1.442695
      %v1297 = vpow.pop %v1296
      %v1298 = vmul.f32 %v1276, 1.442695
      %v1299 = vpow.pop %v1298
      %v1300 = vmul.f32 %v1277, 1.442695
      %v1301 = vpow.pop %v1300
      %v1302 = vmul.f32 %v1278, 1.442695
      %v1303 = vpow.pop %v1302
      %v1304 = vmul.f32 %v1279, 1.442695
      %v1305 = vpow.pop %v1304
      %v1306 = vmul.f32 %v1280, 1.442695
      %v1307 = vpow.pop %v1306
      %v1308 = vmul.f32 %v1281, 1.442695
      %v1309 = vpow.pop %v1308
      %v1310 = vmul.f32 %v1282, 1.442695
      %v1311 = vpow.pop %v1310
      %v1312 = vmul.f32 %v1283, 1.442695
      %v1313 = vpow.pop %v1312
      %v1314 = vmul.f32 %v1284, 1.442695
      %v1315 = vpow.pop %v1314
      %v1316 = vmul.f32 %v1285, 1.442695
      %v1317 = vpow.pop %v1316
      %v1318 = vsel %vm1221, %v1287, 0.0
      %1319 = vadd.xlane.f32.xlu0 %v1318
      %v1320 = vpop.xlane.xlu0 %1319
      %v1321 = vsel %vm1221, %v1289, 0.0
      %1322 = vadd.xlane.f32.xlu0 %v1321
      %v1323 = vpop.xlane.xlu0 %1322
      %v1324 = vsel %vm1221, %v1291, 0.0
      %1325 = vadd.xlane.f32.xlu0 %v1324
      %v1326 = vpop.xlane.xlu0 %1325
      %v1327 = vsel %vm1221, %v1293, 0.0
      %1328 = vadd.xlane.f32.xlu0 %v1327
      %v1329 = vpop.xlane.xlu0 %1328
      %v1330 = vsel %vm1221, %v1295, 0.0
      %1331 = vadd.xlane.f32.xlu0 %v1330
      %v1332 = vpop.xlane.xlu0 %1331
      %v1333 = vsel %vm1221, %v1297, 0.0
      %1334 = vadd.xlane.f32.xlu0 %v1333
      %v1335 = vpop.xlane.xlu0 %1334
      %v1336 = vsel %vm1221, %v1299, 0.0
      %1337 = vadd.xlane.f32.xlu0 %v1336
      %v1338 = vpop.xlane.xlu0 %1337
      %v1339 = vsel %vm1221, %v1301, 0.0
      %1340 = vadd.xlane.f32.xlu0 %v1339
      %v1341 = vpop.xlane.xlu0 %1340
      %v1342 = vsel %vm1221, %v1303, 0.0
      %1343 = vadd.xlane.f32.xlu0 %v1342
      %v1344 = vpop.xlane.xlu0 %1343
      %v1345 = vsel %vm1221, %v1305, 0.0
      %1346 = vadd.xlane.f32.xlu0 %v1345
      %v1347 = vpop.xlane.xlu0 %1346
      %v1348 = vsel %vm1221, %v1307, 0.0
      %1349 = vadd.xlane.f32.xlu0 %v1348
      %v1350 = vpop.xlane.xlu0 %1349
      %v1351 = vsel %vm1221, %v1309, 0.0
      %1352 = vadd.xlane.f32.xlu0 %v1351
      %v1353 = vpop.xlane.xlu0 %1352
      %v1354 = vsel %vm1221, %v1311, 0.0
      %1355 = vadd.xlane.f32.xlu0 %v1354
      %v1356 = vpop.xlane.xlu0 %1355
      %v1357 = vsel %vm1221, %v1313, 0.0
      %1358 = vadd.xlane.f32.xlu0 %v1357
      %v1359 = vpop.xlane.xlu0 %1358
      %v1360 = vsel %vm1221, %v1315, 0.0
      %1361 = vadd.xlane.f32.xlu0 %v1360
      %v1362 = vpop.xlane.xlu0 %1361
      %v1363 = vsel %vm1221, %v1317, 0.0
      %1364 = vadd.xlane.f32.xlu0 %v1363
      %v1365 = vpop.xlane.xlu0 %1364
      %v1366 = vrcp.pop %v1320
      %v1367 = vrcp.pop %v1323
      %v1368 = vrcp.pop %v1326
      %v1369 = vrcp.pop %v1329
      %v1370 = vrcp.pop %v1332
      %v1371 = vrcp.pop %v1335
      %v1372 = vrcp.pop %v1338
      %v1373 = vrcp.pop %v1341
      %v1374 = vrcp.pop %v1344
      %v1375 = vrcp.pop %v1347
      %v1376 = vrcp.pop %v1350
      %v1377 = vrcp.pop %v1353
      %v1378 = vrcp.pop %v1356
      %v1379 = vrcp.pop %v1359
      %v1380 = vrcp.pop %v1362
      %v1381 = vrcp.pop %v1365
      %v1382 = vmul.f32 %v1287, %v1366
      %v1383 = vmul.f32 %v1289, %v1367
      %v1384 = vmul.f32 %v1291, %v1368
      %v1385 = vmul.f32 %v1293, %v1369
      %v1386 = vmul.f32 %v1295, %v1370
      %v1387 = vmul.f32 %v1297, %v1371
      %v1388 = vmul.f32 %v1299, %v1372
      %v1389 = vmul.f32 %v1301, %v1373
      %v1390 = vmul.f32 %v1303, %v1374
      %v1391 = vmul.f32 %v1305, %v1375
      %v1392 = vmul.f32 %v1307, %v1376
      %v1393 = vmul.f32 %v1309, %v1377
      %v1394 = vmul.f32 %v1311, %v1378
      %v1395 = vmul.f32 %v1313, %v1379
      %v1396 = vmul.f32 %v1315, %v1380
      %v1397 = vmul.f32 %v1317, %v1381
      %1398 = vst.msk [vmem:[%s143] sm:$0xff] %vm1221, %v1382
      %1399 = vst.msk [vmem:[%s143 + $0x8] sm:$0xff] %vm1221, %v1383
      %1400 = vst.msk [vmem:[%s143 + $0x10] sm:$0xff] %vm1221, %v1384
      %1401 = vst.msk [vmem:[%s143 + $0x18] sm:$0xff] %vm1221, %v1385
      %1402 = vst.msk [vmem:[%s143 + $0x20] sm:$0xff] %vm1221, %v1386
      %1403 = vst.msk [vmem:[%s143 + $0x28] sm:$0xff] %vm1221, %v1387
      %1404 = vst.msk [vmem:[%s143 + $0x30] sm:$0xff] %vm1221, %v1388
      %1405 = vst.msk [vmem:[%s143 + $0x38] sm:$0xff] %vm1221, %v1389
      %1406 = vst.msk [vmem:[%s143 + $0x40] sm:$0xff] %vm1221, %v1390
      %1407 = vst.msk [vmem:[%s143 + $0x48] sm:$0xff] %vm1221, %v1391
      %1408 = vst.msk [vmem:[%s143 + $0x50] sm:$0xff] %vm1221, %v1392
      %1409 = vst.msk [vmem:[%s143 + $0x58] sm:$0xff] %vm1221, %v1393
      %1410 = vst.msk [vmem:[%s143 + $0x60] sm:$0xff] %vm1221, %v1394
      %1411 = vst.msk [vmem:[%s143 + $0x68] sm:$0xff] %vm1221, %v1395
      %1412 = vst.msk [vmem:[%s143 + $0x70] sm:$0xff] %vm1221, %v1396
      %1413 = vst.msk [vmem:[%s143 + $0x78] sm:$0xff] %vm1221, %v1397
      %p1414 = scmp.lt.s32.totalorder %s13, 1
      %s1415 = scalar_select %p1414, %s13, 1
      %s1416 = smul.addr %s1415, 16
      %s1417 = smul.addr %s1416, 8
      %s1418 = scalar_lea.vmem %s2, %s1417
      // Predicated region
      $region29: #{tpu_custom_call.1} parent=27 // pred_check
        %p1419 = pneg %p78
      $region30: #{tpu_custom_call.1} parent=27 // pred_check_branch
        %1421 = sbr.rel (%p1419) target = $region32
      $region31: #{tpu_custom_call.1} parent=27 // pred_region
        _
      $region32: #{tpu_custom_call.1} parent=27 // pred_fallthru
        _
    $region28: #{tpu_custom_call.1} parent=5 // pred_fallthru
      _
    %p1422 = scmp.le.s32.totalorder 2, %s8
    // Predicated region
    $region33: #{tpu_custom_call.1} parent=5 // pred_check
      %p1423 = pneg %p1422
    $region34: #{tpu_custom_call.1} parent=5 // pred_check_branch
      %1425 = sbr.rel (%p1423) target = $region36
    $region35: #{tpu_custom_call.1} parent=5 // pred_region
      %s1426 = ssub.s32 %s8, 2
      // Predicated region
      $region37: #{tpu_custom_call.1} parent=35 // pred_check
        %p1427 = pneg %p84
      $region38: #{tpu_custom_call.1} parent=35 // pred_check_branch
        %1429 = sbr.rel (%p1427) target = $region40
      $region39: #{tpu_custom_call.1} parent=35 // pred_region
        %p1430 = scmp.lt.s32.totalorder %s14, 1
        %s1431 = scalar_select %p1430, %s14, 1
        %s1432 = smul.addr %s1431, 16
        %s1433 = smul.addr %s1432, 8
        %s1434 = scalar_lea.vmem %s2, %s1433
      $region40: #{tpu_custom_call.1} parent=35 // pred_fallthru
        _
    $region36: #{tpu_custom_call.1} parent=5 // pred_fallthru
      _
  $region6: #{tpu_custom_call.1} parent=0 // loop_footer
    %s12 = sadd.s32 1, %s8
  $region7: #{tpu_custom_call.1} parent=0 // loop_footer_branch
    %7 = sbr.rel target = $region3
  $region8: #{tpu_custom_call.1} parent=0 // loop_exit
    _

</llo_original>
